<compile_context>
chip_gen: v7x
topology: tpu7x:2x2x1
jax: 0.10.0
libtpu: 0.0.40
codegen_flags: <defaults>
</compile_context>

<pallas_src>
import functools

import jax
import jax.numpy as jnp
from jax.experimental import pallas as pl
from jax.experimental.pallas import tpu as pltpu

_LANE = 128
_SUBLANE = 8


def _round_up(x, m):
    return ((x + m - 1) // m) * m


def _tpu_caps():
    """(physical VMEM bytes, TensorCores per chip) with safe fallbacks."""
    vmem_bytes = 128 * 1024 * 1024
    num_cores = 1
    try:
        info = pltpu.get_tpu_info()
        vmem_bytes = int(getattr(info, "vmem_capacity_bytes", vmem_bytes) or vmem_bytes)
        num_cores = int(getattr(info, "num_cores", num_cores) or num_cores)
    except Exception:
        pass
    try:
        dev_cores = int(getattr(jax.local_devices()[0], "num_cores", 1) or 1)
        num_cores = max(num_cores, dev_cores)
    except Exception:
        pass
    return vmem_bytes, num_cores


def _highway_stack_kernel(x_ref, w_ref, b_ref, o_ref, *, num_layers, d_pad):
    """All highway layers on one (tm, d_pad) row tile kept resident in VMEM.

    w_ref: (L, d_pad, 2*d_pad)  -- columns [:d_pad] nonlinear, [d_pad:] gate
    b_ref: (L, 1, 2*d_pad)      -- f32 biases
    """

    def one_layer(layer, cur):
        # One fused (tm, d_pad) x (d_pad, 2*d_pad) GEMM, f32 accumulation.
        y = jnp.dot(cur, w_ref[layer], preferred_element_type=jnp.float32)
        y = y + b_ref[layer]                 # (tm, 2*d_pad), single bias add
        nl = jnp.maximum(y[:, :d_pad], 0.0)  # relu(nonlinear part)
        g = jax.nn.sigmoid(y[:, d_pad:])     # gate
        # g*cur + (1-g)*nl  ==  nl + g*(cur - nl)   (one fewer mul / temp)
        blended = nl + g * (cur.astype(jnp.float32) - nl)
        return blended.astype(x_ref.dtype)

    cur = x_ref[...]  # matmul operands stay in the input dtype (bf16-friendly)
    if num_layers <= 8:
        for layer in range(num_layers):      # small static L -> unrolled
            cur = one_layer(layer, cur)
    else:
        # Large L: rolled loop bounds live ranges / code size.
        cur = jax.lax.fori_loop(0, num_layers, one_layer, cur)
    o_ref[...] = cur.astype(o_ref.dtype)


def _pick_tm(n_rows, d_pad, num_layers, x_itemsize, vmem_budget_bytes, num_cores):
    """Largest row tile fitting the VMEM budget, with a core-aware step policy."""
    # Weight stack is cast to the activation dtype and (with Buffered(1))
    # single-buffered; bias stack stays f32.
    w_bytes = num_layers * d_pad * (2 * d_pad) * x_itemsize
    b_bytes = num_layers * (2 * d_pad) * 4
    avail = max(vmem_budget_bytes - w_bytes - b_bytes, 1 << 20)
    # TODO(synk): when the weight stack approaches ~half of VMEM (large D on
    # v7x), stream weights from HBM (memory_space=pl.ANY + per-layer
    # double-buffered DMA) instead of clamping `avail`.

    # Per-row footprint: double-buffered in+out tiles in the activation dtype
    # plus ~3 live f32 intermediates of width 2*d_pad inside the layer loop.
    per_row = 4 * d_pad * x_itemsize + 3 * (2 * d_pad) * 4
    tm = int(avail // per_row)
    tm = max(_SUBLANE, min(1024, (tm // _SUBLANE) * _SUBLANE))

    n_pad8 = _round_up(max(n_rows, _SUBLANE), _SUBLANE)
    if num_cores > 1:
        # Multi-TC chips (v7x): keep >= 2*num_cores grid steps when N allows so
        # each core still gets double-buffered input-prefetch/writeback overlap.
        target_steps = 2 * num_cores
        if n_pad8 >= target_steps * _SUBLANE:
            max_tm = max(_SUBLANE, ((n_pad8 // target_steps) // _SUBLANE) * _SUBLANE)
            tm = min(tm, max_tm)
    # Single-TC chips (v5e/v6e): the grid is a serial loop; never force a split.
    return min(tm, n_pad8)


def prepare_highway_params(params, input_dim):
    """One-time preprocessing: transpose, concat nonlinear|gate, pad, stack.

    params: list of (w, b) with w: (2D, D), b: (2D,) as in torch.nn.Linear.
    Returns (w_stack, b_stack) with shapes (L, D_pad, 2*D_pad), (L, 1, 2*D_pad).
    """
    d = input_dim
    d_pad = _round_up(max(d, _LANE), _LANE)
    n_layers = len(params)
    w_stack = jnp.zeros((n_layers, d_pad, 2 * d_pad), jnp.float32)
    b_stack = jnp.zeros((n_layers, 1, 2 * d_pad), jnp.float32)
    for l, (w, b) in enumerate(params):
        w = jnp.asarray(w, jnp.float32)
        b = jnp.asarray(b, jnp.float32)
        w_stack = w_stack.at[l, :d, :d].set(w[:d, :].T)               # nonlinear
        w_stack = w_stack.at[l, :d, d_pad:d_pad + d].set(w[d:, :].T)  # gate
        b_stack = b_stack.at[l, 0, :d].set(b[:d])
        b_stack = b_stack.at[l, 0, d_pad:d_pad + d].set(b[d:])
    return w_stack, b_stack


def _run_highway_call(xp, w_k, b_stack, *, tm, n_layers, d_pad, vmem_limit_bytes):
    n_pad = xp.shape[0]
    two_d_pad = 2 * d_pad
    kernel = functools.partial(_highway_stack_kernel,
                               num_layers=n_layers, d_pad=d_pad)

    def build(use_buffered):
        const_kwargs = {"pipeline_mode": pl.Buffered(1)} if use_buffered else {}
        return pl.pallas_call(
            kernel,
            out_shape=jax.ShapeDtypeStruct((n_pad, d_pad), xp.dtype),
            grid_spec=pltpu.PrefetchScalarGridSpec(
                num_scalar_prefetch=0,
                grid=(n_pad // tm,),
                in_specs=[
                    # activation rows (pipelined, double-buffered)
                    pl.BlockSpec((tm, d_pad), lambda i: (i, 0)),
                    # weights / bias: constant index_map -> single buffer
                    pl.BlockSpec((n_layers, d_pad, two_d_pad),
                                 lambda i: (0, 0, 0), **const_kwargs),
                    pl.BlockSpec((n_layers, 1, two_d_pad),
                                 lambda i: (0, 0, 0), **const_kwargs),
                ],
                out_specs=pl.BlockSpec((tm, d_pad), lambda i: (i, 0)),
            ),
            compiler_params=pltpu.CompilerParams(
                dimension_semantics=("parallel",),
                vmem_limit_bytes=int(vmem_limit_bytes),
            ),
        )

    try:
        return build(True)(xp, w_k, b_stack)
    except Exception:
        # Some JAX versions reject pipeline_mode=Buffered(1); the plain
        # (double-buffered) spec is still correct, just uses more VMEM.
        return build(False)(xp, w_k, b_stack)


def highway_forward(x, w_stack, b_stack, *, tm=None, vmem_limit_bytes=None):
    """Apply the fused Highway stack to x of shape (..., D)."""
    n_layers, d_pad, _ = w_stack.shape
    d = x.shape[-1]
    orig_shape = x.shape
    x2d = x.reshape(-1, d)
    n = x2d.shape[0]

    vmem_cap, num_cores = _tpu_caps()
    if vmem_limit_bytes is None:
        # ~80% of physical VMEM: ~100 MiB on 128 MiB chips (v5e/v6e),
        # ~51 MiB on 64 MiB chips (v7x).
        vmem_limit_bytes = max(32 * 1024 * 1024, int(vmem_cap * 0.8))
    vmem_budget = int(vmem_limit_bytes * 0.9)

    if tm is None:
        tm = _pick_tm(n, d_pad, n_layers, jnp.dtype(x.dtype).itemsize,
                      vmem_budget, num_cores)

    # bf16 inputs -> bf16 weights so the MXU runs at full rate; f32 is a no-op.
    w_k = w_stack.astype(x.dtype)

    # Elide the materialized pad/unpad copies when the input is already
    # lane-dense and the row count divides the tile (HBM-bound small-D regime:
    # those copies would roughly double end-to-end HBM traffic).
    needs_pad = (n == 0) or (d != d_pad) or (n % tm != 0)
    if needs_pad:
        n_pad = _round_up(max(n, _SUBLANE), tm)
        xp = jnp.zeros((n_pad, d_pad), x.dtype).at[:n, :d].set(x2d)
        # TODO(synk): handle a pure row-remainder with a masked last block
        # instead of a full padded copy.
    else:
        xp = x2d

    out = _run_highway_call(xp, w_k, b_stack, tm=tm, n_layers=n_layers,
                            d_pad=d_pad, vmem_limit_bytes=vmem_limit_bytes)

    if needs_pad:
        out = out[:n, :d]
    return out.reshape(orig_shape)


def init_highway_params(key, input_dim, num_layers):
    """Deterministic init matching nn.Linear defaults + gate-bias = 1."""
    params = []
    bound = 1.0 / jnp.sqrt(jnp.float32(input_dim))
    for _ in range(num_layers):
        key, kw, kb = jax.random.split(key, 3)
        w = jax.random.uniform(kw, (2 * input_dim, input_dim),
                               minval=-bound, maxval=bound, dtype=jnp.float32)
        b = jax.random.uniform(kb, (2 * input_dim,),
                               minval=-bound, maxval=bound, dtype=jnp.float32)
        b = b.at[input_dim:].set(1.0)  # layer.bias[input_dim:].data.fill_(1)
        params.append((w, b))
    return params


def highway_reference(x, params):
    """Pure-JAX reference implementation for sanity checking."""
    d = x.shape[-1]
    cur = x
    for (w, b) in params:
        proj = cur @ w.T + b
        nonlinear, gate = proj[..., :d], proj[..., d:]
        nonlinear = jnp.maximum(nonlinear, 0.0)
        gate = jax.nn.sigmoid(gate)
        cur = gate * cur + (1.0 - gate) * nonlinear
    return cur


if __name__ == "__main__":
    input_dim = 32
    num_layers = 2
    batch, seq = 2, 8

    key = jax.random.PRNGKey(0)
    key, kx = jax.random.split(key)
    x = jax.random.normal(kx, (batch, seq, input_dim), dtype=jnp.float32)

    params = init_highway_params(key, input_dim, num_layers)
    w_stack, b_stack = prepare_highway_params(params, input_dim)

    out = highway_forward(x, w_stack, b_stack)
    out = jax.block_until_ready(out)

    ref = highway_reference(x, params)
    assert out.shape == x.shape
    assert jnp.allclose(out, ref, atol=1e-5, rtol=1e-5), "mismatch vs reference"

    print("KERNEL_OK")
</pallas_src>

<mosaic_0001>
module attributes {stable_mosaic.version = 11 : i64} {
  func.func @_highway_stack_kernel(%arg0: i32, %arg1: memref<16x128xf32, #tpu.memory_space<vmem>>, %arg2: memref<2x128x256xf32, #tpu.memory_space<vmem>>, %arg3: memref<2x1x256xf32, #tpu.memory_space<vmem>>, %arg4: memref<16x128xf32, #tpu.memory_space<vmem>>) attributes {dimension_semantics = [#tpu.dimension_semantics<parallel>], iteration_bounds = array<i64: 1>, scalar_prefetch = 0 : i64, scratch_operands = 0 : i64, tpu.core_type = #tpu.core_type<tc>, window_params = [{transform_indices = @transform_0, window_bounds = array<i64: 16, 128>}, {pipeline_mode = #tpu.pipeline_mode<synchronous>, transform_indices = @transform_1, window_bounds = array<i64: 2, 128, 256>}, {pipeline_mode = #tpu.pipeline_mode<synchronous>, transform_indices = @transform_2, window_bounds = array<i64: 2, 1, 256>}, {transform_indices = @transform_3, window_bounds = array<i64: 16, 128>}]} {
    %c0 = arith.constant 0 : index
    %c0_0 = arith.constant 0 : index
    %0 = vector.load %arg1[%c0, %c0_0] : memref<16x128xf32, #tpu.memory_space<vmem>>, vector<16x128xf32>
    %c0_1 = arith.constant 0 : index
    %c0_2 = arith.constant 0 : index
    %c0_3 = arith.constant 0 : index
    %1 = vector.load %arg2[%c0_1, %c0_2, %c0_3] : memref<2x128x256xf32, #tpu.memory_space<vmem>>, vector<1x128x256xf32>
    %2 = vector.shape_cast %1 : vector<1x128x256xf32> to vector<128x256xf32>
    %cst = arith.constant dense<0.000000e+00> : vector<16x256xf32>
    %3 = tpu.matmul %0, %2, %cst {dimension_numbers = #tpu.dot_dimension_numbers<[1], [0], [0], [1], [0, 0, 1, 1], [], []>} : vector<16x128xf32>, vector<128x256xf32>, vector<16x256xf32> -> vector<16x256xf32>
    %c0_4 = arith.constant 0 : index
    %c0_5 = arith.constant 0 : index
    %c0_6 = arith.constant 0 : index
    %4 = vector.load %arg3[%c0_4, %c0_5, %c0_6] : memref<2x1x256xf32, #tpu.memory_space<vmem>>, vector<1x1x256xf32>
    %5 = vector.shape_cast %4 : vector<1x1x256xf32> to vector<1x256xf32>
    %6 = vector.broadcast %5 : vector<1x256xf32> to vector<16x256xf32>
    %7 = arith.addf %3, %6 : vector<16x256xf32>
    %8 = vector.extract_strided_slice %7 {offsets = [0, 0], sizes = [16, 128], strides = [1, 1]} : vector<16x256xf32> to vector<16x128xf32>
    %cst_7 = arith.constant 0.000000e+00 : f32
    %9 = vector.broadcast %cst_7 : f32 to vector<16x128xf32>
    %10 = arith.maximumf %8, %9 : vector<16x128xf32>
    %11 = vector.extract_strided_slice %7 {offsets = [0, 128], sizes = [16, 128], strides = [1, 1]} : vector<16x256xf32> to vector<16x128xf32>
    %12 = arith.negf %11 : vector<16x128xf32>
    %13 = math.exp %12 : vector<16x128xf32>
    %cst_8 = arith.constant 1.000000e+00 : f32
    %14 = vector.broadcast %cst_8 : f32 to vector<16x128xf32>
    %15 = arith.addf %14, %13 : vector<16x128xf32>
    %16 = arith.divf %14, %15 : vector<16x128xf32>
    %17 = arith.subf %0, %10 : vector<16x128xf32>
    %18 = arith.mulf %16, %17 : vector<16x128xf32>
    %19 = arith.addf %10, %18 : vector<16x128xf32>
    %c1 = arith.constant 1 : index
    %c0_9 = arith.constant 0 : index
    %c0_10 = arith.constant 0 : index
    %20 = vector.load %arg2[%c1, %c0_9, %c0_10] : memref<2x128x256xf32, #tpu.memory_space<vmem>>, vector<1x128x256xf32>
    %21 = vector.shape_cast %20 : vector<1x128x256xf32> to vector<128x256xf32>
    %cst_11 = arith.constant dense<0.000000e+00> : vector<16x256xf32>
    %22 = tpu.matmul %19, %21, %cst_11 {dimension_numbers = #tpu.dot_dimension_numbers<[1], [0], [0], [1], [0, 0, 1, 1], [], []>} : vector<16x128xf32>, vector<128x256xf32>, vector<16x256xf32> -> vector<16x256xf32>
    %c1_12 = arith.constant 1 : index
    %c0_13 = arith.constant 0 : index
    %c0_14 = arith.constant 0 : index
    %23 = vector.load %arg3[%c1_12, %c0_13, %c0_14] : memref<2x1x256xf32, #tpu.memory_space<vmem>>, vector<1x1x256xf32>
    %24 = vector.shape_cast %23 : vector<1x1x256xf32> to vector<1x256xf32>
    %25 = vector.broadcast %24 : vector<1x256xf32> to vector<16x256xf32>
    %26 = arith.addf %22, %25 : vector<16x256xf32>
    %27 = vector.extract_strided_slice %26 {offsets = [0, 0], sizes = [16, 128], strides = [1, 1]} : vector<16x256xf32> to vector<16x128xf32>
    %cst_15 = arith.constant 0.000000e+00 : f32
    %28 = vector.broadcast %cst_15 : f32 to vector<16x128xf32>
    %29 = arith.maximumf %27, %28 : vector<16x128xf32>
    %30 = vector.extract_strided_slice %26 {offsets = [0, 128], sizes = [16, 128], strides = [1, 1]} : vector<16x256xf32> to vector<16x128xf32>
    %31 = arith.negf %30 : vector<16x128xf32>
    %32 = math.exp %31 : vector<16x128xf32>
    %cst_16 = arith.constant 1.000000e+00 : f32
    %33 = vector.broadcast %cst_16 : f32 to vector<16x128xf32>
    %34 = arith.addf %33, %32 : vector<16x128xf32>
    %35 = arith.divf %33, %34 : vector<16x128xf32>
    %36 = arith.subf %19, %29 : vector<16x128xf32>
    %37 = arith.mulf %35, %36 : vector<16x128xf32>
    %38 = arith.addf %29, %37 : vector<16x128xf32>
    %c0_17 = arith.constant 0 : index
    %c0_18 = arith.constant 0 : index
    %39 = vector.load %arg4[%c0_17, %c0_18] : memref<16x128xf32, #tpu.memory_space<vmem>>, vector<16x128xf32>
    tpu.vector_store %arg4[%c0_17, %c0_18], %38 {strides = array<i32>} : memref<16x128xf32, #tpu.memory_space<vmem>>, vector<16x128xf32>,
    return
  }
  func.func @transform_0(%arg0: i32) -> (i32, i32) {
    %c0_i32 = arith.constant 0 : i32
    %c0_i32_0 = arith.constant 0 : i32
    return %arg0, %c0_i32 : i32, i32
  }
  func.func @transform_1(%arg0: i32) -> (i32, i32, i32) {
    %c0_i32 = arith.constant 0 : i32
    %c0_i32_0 = arith.constant 0 : i32
    %c0_i32_1 = arith.constant 0 : i32
    %c0_i32_2 = arith.constant 0 : i32
    return %c0_i32, %c0_i32_0, %c0_i32_1 : i32, i32, i32
  }
  func.func @transform_2(%arg0: i32) -> (i32, i32, i32) {
    %c0_i32 = arith.constant 0 : i32
    %c0_i32_0 = arith.constant 0 : i32
    %c0_i32_1 = arith.constant 0 : i32
    %c0_i32_2 = arith.constant 0 : i32
    return %c0_i32, %c0_i32_0, %c0_i32_1 : i32, i32, i32
  }
  func.func @transform_3(%arg0: i32) -> (i32, i32) {
    %c0_i32 = arith.constant 0 : i32
    %c0_i32_0 = arith.constant 0 : i32
    return %arg0, %c0_i32 : i32, i32
  }
}

module attributes {stable_mosaic.version = 11 : i64} {
  func.func @_highway_stack_kernel(%arg0: i32, %arg1: memref<16x128xf32, #tpu.memory_space<vmem>>, %arg2: memref<2x128x256xf32, #tpu.memory_space<vmem>>, %arg3: memref<2x1x256xf32, #tpu.memory_space<vmem>>, %arg4: memref<16x128xf32, #tpu.memory_space<vmem>>) attributes {dimension_semantics = [#tpu.dimension_semantics<parallel>], iteration_bounds = array<i64: 1>, scalar_prefetch = 0 : i64, scratch_operands = 0 : i64, tpu.core_type = #tpu.core_type<tc>, window_params = [{transform_indices = @transform_0, window_bounds = array<i64: 16, 128>}, {pipeline_mode = #tpu.pipeline_mode<synchronous>, transform_indices = @transform_1, window_bounds = array<i64: 2, 128, 256>}, {pipeline_mode = #tpu.pipeline_mode<synchronous>, transform_indices = @transform_2, window_bounds = array<i64: 2, 1, 256>}, {transform_indices = @transform_3, window_bounds = array<i64: 16, 128>}]} {
    %c0 = arith.constant 0 : index
    %c0_0 = arith.constant 0 : index
    %0 = vector.load %arg1[%c0, %c0_0] : memref<16x128xf32, #tpu.memory_space<vmem>>, vector<16x128xf32>
    %c0_1 = arith.constant 0 : index
    %c0_2 = arith.constant 0 : index
    %c0_3 = arith.constant 0 : index
    %1 = vector.load %arg2[%c0_1, %c0_2, %c0_3] : memref<2x128x256xf32, #tpu.memory_space<vmem>>, vector<1x128x256xf32>
    %2 = vector.shape_cast %1 : vector<1x128x256xf32> to vector<128x256xf32>
    %cst = arith.constant dense<0.000000e+00> : vector<16x256xf32>
    %3 = tpu.matmul %0, %2, %cst {dimension_numbers = #tpu.dot_dimension_numbers<[1], [0], [0], [1], [0, 0, 1, 1], [], []>} : vector<16x128xf32>, vector<128x256xf32>, vector<16x256xf32> -> vector<16x256xf32>
    %c0_4 = arith.constant 0 : index
    %c0_5 = arith.constant 0 : index
    %c0_6 = arith.constant 0 : index
    %4 = vector.load %arg3[%c0_4, %c0_5, %c0_6] : memref<2x1x256xf32, #tpu.memory_space<vmem>>, vector<1x1x256xf32>
    %5 = vector.shape_cast %4 : vector<1x1x256xf32> to vector<1x256xf32>
    %6 = vector.broadcast %5 : vector<1x256xf32> to vector<16x256xf32>
    %7 = arith.addf %3, %6 : vector<16x256xf32>
    %8 = vector.extract_strided_slice %7 {offsets = [0, 0], sizes = [16, 128], strides = [1, 1]} : vector<16x256xf32> to vector<16x128xf32>
    %cst_7 = arith.constant 0.000000e+00 : f32
    %9 = vector.broadcast %cst_7 : f32 to vector<16x128xf32>
    %10 = arith.maximumf %8, %9 : vector<16x128xf32>
    %11 = vector.extract_strided_slice %7 {offsets = [0, 128], sizes = [16, 128], strides = [1, 1]} : vector<16x256xf32> to vector<16x128xf32>
    %12 = arith.negf %11 : vector<16x128xf32>
    %13 = math.exp %12 : vector<16x128xf32>
    %cst_8 = arith.constant 1.000000e+00 : f32
    %14 = vector.broadcast %cst_8 : f32 to vector<16x128xf32>
    %15 = arith.addf %14, %13 : vector<16x128xf32>
    %16 = arith.divf %14, %15 : vector<16x128xf32>
    %17 = arith.subf %0, %10 : vector<16x128xf32>
    %18 = arith.mulf %16, %17 : vector<16x128xf32>
    %19 = arith.addf %10, %18 : vector<16x128xf32>
    %c1 = arith.constant 1 : index
    %c0_9 = arith.constant 0 : index
    %c0_10 = arith.constant 0 : index
    %20 = vector.load %arg2[%c1, %c0_9, %c0_10] : memref<2x128x256xf32, #tpu.memory_space<vmem>>, vector<1x128x256xf32>
    %21 = vector.shape_cast %20 : vector<1x128x256xf32> to vector<128x256xf32>
    %cst_11 = arith.constant dense<0.000000e+00> : vector<16x256xf32>
    %22 = tpu.matmul %19, %21, %cst_11 {dimension_numbers = #tpu.dot_dimension_numbers<[1], [0], [0], [1], [0, 0, 1, 1], [], []>} : vector<16x128xf32>, vector<128x256xf32>, vector<16x256xf32> -> vector<16x256xf32>
    %c1_12 = arith.constant 1 : index
    %c0_13 = arith.constant 0 : index
    %c0_14 = arith.constant 0 : index
    %23 = vector.load %arg3[%c1_12, %c0_13, %c0_14] : memref<2x1x256xf32, #tpu.memory_space<vmem>>, vector<1x1x256xf32>
    %24 = vector.shape_cast %23 : vector<1x1x256xf32> to vector<1x256xf32>
    %25 = vector.broadcast %24 : vector<1x256xf32> to vector<16x256xf32>
    %26 = arith.addf %22, %25 : vector<16x256xf32>
    %27 = vector.extract_strided_slice %26 {offsets = [0, 0], sizes = [16, 128], strides = [1, 1]} : vector<16x256xf32> to vector<16x128xf32>
    %cst_15 = arith.constant 0.000000e+00 : f32
    %28 = vector.broadcast %cst_15 : f32 to vector<16x128xf32>
    %29 = arith.maximumf %27, %28 : vector<16x128xf32>
    %30 = vector.extract_strided_slice %26 {offsets = [0, 128], sizes = [16, 128], strides = [1, 1]} : vector<16x256xf32> to vector<16x128xf32>
    %31 = arith.negf %30 : vector<16x128xf32>
    %32 = math.exp %31 : vector<16x128xf32>
    %cst_16 = arith.constant 1.000000e+00 : f32
    %33 = vector.broadcast %cst_16 : f32 to vector<16x128xf32>
    %34 = arith.addf %33, %32 : vector<16x128xf32>
    %35 = arith.divf %33, %34 : vector<16x128xf32>
    %36 = arith.subf %19, %29 : vector<16x128xf32>
    %37 = arith.mulf %35, %36 : vector<16x128xf32>
    %38 = arith.addf %29, %37 : vector<16x128xf32>
    %c0_17 = arith.constant 0 : index
    %c0_18 = arith.constant 0 : index
    %39 = vector.load %arg4[%c0_17, %c0_18] : memref<16x128xf32, #tpu.memory_space<vmem>>, vector<16x128xf32>
    tpu.vector_store %arg4[%c0_17, %c0_18], %38 {strides = array<i32>} : memref<16x128xf32, #tpu.memory_space<vmem>>, vector<16x128xf32>,
    return
  }
  func.func @transform_0(%arg0: i32) -> (i32, i32) {
    %c0_i32 = arith.constant 0 : i32
    %c0_i32_0 = arith.constant 0 : i32
    return %arg0, %c0_i32 : i32, i32
  }
  func.func @transform_1(%arg0: i32) -> (i32, i32, i32) {
    %c0_i32 = arith.constant 0 : i32
    %c0_i32_0 = arith.constant 0 : i32
    %c0_i32_1 = arith.constant 0 : i32
    %c0_i32_2 = arith.constant 0 : i32
    return %c0_i32, %c0_i32_0, %c0_i32_1 : i32, i32, i32
  }
  func.func @transform_2(%arg0: i32) -> (i32, i32, i32) {
    %c0_i32 = arith.constant 0 : i32
    %c0_i32_0 = arith.constant 0 : i32
    %c0_i32_1 = arith.constant 0 : i32
    %c0_i32_2 = arith.constant 0 : i32
    return %c0_i32, %c0_i32_0, %c0_i32_1 : i32, i32, i32
  }
  func.func @transform_3(%arg0: i32) -> (i32, i32) {
    %c0_i32 = arith.constant 0 : i32
    %c0_i32_0 = arith.constant 0 : i32
    return %arg0, %c0_i32 : i32, i32
  }
}

</mosaic_0001>

<llo_original>
// kernel: tpu_custom_call.1
$region0: #{tpu_custom_call.1}
  #allocation0 [shape = 'u32[]', space=smem, size = 0x4, offset = 0x4, fixed_abs, tag = 'smem constant byte address 0x4 - core index']
  #allocation1 [shape = 'u32[144,128]{1,0:T(1,128)}', space=vmem, size = 0x12000, scoped, tag = 'internal scratch']
  %s0 = inlined_call_operand.hbm [shape: f32[16,128], index: 0, kind: input, shape index: {}]
  %s1 = inlined_call_operand.hbm [shape: f32[2,128,256], index: 1, kind: input, shape index: {}]
  %s2 = inlined_call_operand.hbm [shape: f32[2,1,256], index: 2, kind: input, shape index: {}]
  %s3 = inlined_call_operand.hbm [shape: f32[16,128], index: 3, kind: output, shape index: {}]
  %s4 = sld [smem:[#allocation0]]
  $region34: #{tpu_custom_call.1} parent=0
    _
  %s6 = ssub.s32 1, %s4
  %s7 = scalar_select 0, %s6, %s4
  $region1: #{tpu_custom_call.1} parent=0
    #allocation2 [shape = 'u8[8192]{0}', space=vmem, size = 0x2000, scoped, tag = 'input window, operand 0, single buffered']
    #allocation3 [shape = 's32[1]{0}', space=sflag, size = 0x4, scoped, tag = 'scoped memory for tpu_custom_call.1']
    #allocation4 [shape = 's32[1]{0}', space=sflag, size = 0x4, scoped, tag = 'scoped memory for tpu_custom_call.1']
    #allocation5 [shape = 'u8[262144]{0}', space=vmem, size = 0x40000, scoped, tag = 'input window, operand 1, single buffered']
    #allocation6 [shape = 's32[1]{0}', space=sflag, size = 0x4, scoped, tag = 'scoped memory for tpu_custom_call.1']
    #allocation7 [shape = 'u8[2048]{0}', space=vmem, size = 0x800, scoped, tag = 'input window, operand 2, single buffered']
    #allocation8 [shape = 'u8[8192]{0}', space=vmem, size = 0x2000, scoped, tag = 'output window, operand 0, single buffered']
    %8 = vsyncpa [#allocation3], 0
    %9 = vsyncpa [#allocation6], 0
    %10 = vsyncpa [#allocation4], 0
    // Predicated region
    $region2: #{tpu_custom_call.1} parent=1 // pred_check
      _
    $region3: #{tpu_custom_call.1} parent=1 // pred_check_branch
      %12 = sbr.rel (0) target = $region5
    $region4: #{tpu_custom_call.1} parent=1 // pred_region
      %s14 = ssub.s32 256, 256
      %15 = vsyncadd [#allocation3], %s14
      %s16 = sshll.u32 [#allocation2], 4
      %s17 = int_to_ptr.vmem [resolvable:$true] %s16
      %22 = dma.hbm_to_vmem [thread:$0]  %s0, 256, %s17, [#allocation3], 128, 128, 8
    $region5: #{tpu_custom_call.1} parent=1 // pred_fallthru
      _
    // Predicated region
    $region6: #{tpu_custom_call.1} parent=1 // pred_check
      _
    $region7: #{tpu_custom_call.1} parent=1 // pred_check_branch
      %24 = sbr.rel (0) target = $region9
    $region8: #{tpu_custom_call.1} parent=1 // pred_region
      %s26 = ssub.s32 8192, 8192
      %27 = vsyncadd [#allocation6], %s26
      %s28 = sshll.u32 [#allocation5], 4
      %s29 = int_to_ptr.vmem [resolvable:$true] %s28
      %34 = dma.hbm_to_vmem [thread:$0]  %s1, 8192, %s29, [#allocation6], 256, 256, 16
    $region9: #{tpu_custom_call.1} parent=1 // pred_fallthru
      _
    // Predicated region
    $region10: #{tpu_custom_call.1} parent=1 // pred_check
      _
    $region11: #{tpu_custom_call.1} parent=1 // pred_check_branch
      %36 = sbr.rel (0) target = $region13
    $region12: #{tpu_custom_call.1} parent=1 // pred_region
      %s38 = ssub.s32 64, 64
      %39 = vsyncadd [#allocation6], %s38
      %s40 = sshll.u32 [#allocation7], 4
      %s41 = int_to_ptr.vmem [resolvable:$true] %s40
      %46 = dma.hbm_to_vmem [thread:$0]  %s2, 64, %s41, [#allocation6], 32, 32, 2
    $region13: #{tpu_custom_call.1} parent=1 // pred_fallthru
      _
    // Predicated region
    $region14: #{tpu_custom_call.1} parent=1 // pred_check
      _
    $region15: #{tpu_custom_call.1} parent=1 // pred_check_branch
      %48 = sbr.rel (0) target = $region17
    $region16: #{tpu_custom_call.1} parent=1 // pred_region
      %49 = dma.done [#allocation3], 256
    $region17: #{tpu_custom_call.1} parent=1 // pred_fallthru
      _
    // Predicated region
    $region18: #{tpu_custom_call.1} parent=1 // pred_check
      _
    $region19: #{tpu_custom_call.1} parent=1 // pred_check_branch
      %51 = sbr.rel (0) target = $region21
    $region20: #{tpu_custom_call.1} parent=1 // pred_region
      %52 = dma.done [#allocation6], 8192
    $region21: #{tpu_custom_call.1} parent=1 // pred_fallthru
      _
    // Predicated region
    $region22: #{tpu_custom_call.1} parent=1 // pred_check
      _
    $region23: #{tpu_custom_call.1} parent=1 // pred_check_branch
      %54 = sbr.rel (0) target = $region25
    $region24: #{tpu_custom_call.1} parent=1 // pred_region
      %55 = dma.done [#allocation6], 64
    $region25: #{tpu_custom_call.1} parent=1 // pred_fallthru
      _
    %v56 = vld [vmem:[#allocation2] sm:$0xff]
    %v57 = vld [vmem:[#allocation2 + $0x8] sm:$0xff]
    %v58 = vld [vmem:[#allocation5] sm:$0xff]
    %v59 = vld [vmem:[#allocation5 + $0x8] sm:$0xff]
    %v60 = vld [vmem:[#allocation5 + $0x10] sm:$0xff]
    %v61 = vld [vmem:[#allocation5 + $0x18] sm:$0xff]
    %v62 = vld [vmem:[#allocation5 + $0x20] sm:$0xff]
    %v63 = vld [vmem:[#allocation5 + $0x28] sm:$0xff]
    %v64 = vld [vmem:[#allocation5 + $0x30] sm:$0xff]
    %v65 = vld [vmem:[#allocation5 + $0x38] sm:$0xff]
    %v66 = vld [vmem:[#allocation5 + $0x40] sm:$0xff]
    %v67 = vld [vmem:[#allocation5 + $0x48] sm:$0xff]
    %v68 = vld [vmem:[#allocation5 + $0x50] sm:$0xff]
    %v69 = vld [vmem:[#allocation5 + $0x58] sm:$0xff]
    %v70 = vld [vmem:[#allocation5 + $0x60] sm:$0xff]
    %v71 = vld [vmem:[#allocation5 + $0x68] sm:$0xff]
    %v72 = vld [vmem:[#allocation5 + $0x70] sm:$0xff]
    %v73 = vld [vmem:[#allocation5 + $0x78] sm:$0xff]
    %v74 = vld [vmem:[#allocation5 + $0x80] sm:$0xff]
    %v75 = vld [vmem:[#allocation5 + $0x88] sm:$0xff]
    %v76 = vld [vmem:[#allocation5 + $0x90] sm:$0xff]
    %v77 = vld [vmem:[#allocation5 + $0x98] sm:$0xff]
    %v78 = vld [vmem:[#allocation5 + $0xa0] sm:$0xff]
    %v79 = vld [vmem:[#allocation5 + $0xa8] sm:$0xff]
    %v80 = vld [vmem:[#allocation5 + $0xb0] sm:$0xff]
    %v81 = vld [vmem:[#allocation5 + $0xb8] sm:$0xff]
    %v82 = vld [vmem:[#allocation5 + $0xc0] sm:$0xff]
    %v83 = vld [vmem:[#allocation5 + $0xc8] sm:$0xff]
    %v84 = vld [vmem:[#allocation5 + $0xd0] sm:$0xff]
    %v85 = vld [vmem:[#allocation5 + $0xd8] sm:$0xff]
    %v86 = vld [vmem:[#allocation5 + $0xe0] sm:$0xff]
    %v87 = vld [vmem:[#allocation5 + $0xe8] sm:$0xff]
    %v88 = vld [vmem:[#allocation5 + $0xf0] sm:$0xff]
    %v89 = vld [vmem:[#allocation5 + $0xf8] sm:$0xff]
    %v90 = vld [vmem:[#allocation7] sm:$0x3]
    %v92 = vlaneseq
    %v93 = vshrl.u32 %v92, 7
    %v94 = vsub.s32 0, %v93
    %v95 = vrot.slane %v90, %v94
    %v96 = vlaneseq
    %v97 = vshrl.u32 %v96, 7
    %v98 = vsub.s32 1, %v97
    %v99 = vrot.slane %v90, %v98
    %102 = vmatprep.subr.mxu0 %v59
    %103 = vmatpush1.msra.mxu0 %v58
    %104 = vmatprep.subr.mxu0 %v61
    %105 = vmatpush1.msra.mxu0 %v60
    %106 = vmatprep.subr.mxu0 %v63
    %107 = vmatpush1.msra.mxu0 %v62
    %108 = vmatprep.subr.mxu0 %v65
    %109 = vmatpush1.msra.mxu0 %v64
    %110 = vmatprep.subr.mxu0 %v67
    %111 = vmatpush1.msra.mxu0 %v66
    %112 = vmatprep.subr.mxu0 %v69
    %113 = vmatpush1.msra.mxu0 %v68
    %114 = vmatprep.subr.mxu0 %v71
    %115 = vmatpush1.msra.mxu0 %v70
    %116 = vmatprep.subr.mxu0 %v73
    %117 = vmatpush1.msra.mxu0 %v72
    %118 = vmatprep.subr.mxu0 %v75
    %119 = vmatpush1.msra.mxu0 %v74
    %120 = vmatprep.subr.mxu0 %v77
    %121 = vmatpush1.msra.mxu0 %v76
    %122 = vmatprep.subr.mxu0 %v79
    %123 = vmatpush1.msra.mxu0 %v78
    %124 = vmatprep.subr.mxu0 %v81
    %125 = vmatpush1.msra.mxu0 %v80
    %126 = vmatprep.subr.mxu0 %v83
    %127 = vmatpush1.msra.mxu0 %v82
    %128 = vmatprep.subr.mxu0 %v85
    %129 = vmatpush1.msra.mxu0 %v84
    %130 = vmatprep.subr.mxu0 %v87
    %131 = vmatpush1.msra.mxu0 %v86
    %132 = vmatprep.subr.mxu0 %v89
    %133 = vmatpush1.msra.mxu0 %v88
    %134 = vmatprep.subr.mxu0 0.0
    %135 = vmatpush1.msra.mxu0 0.0
    %136 = vmatprep.subr.mxu0 0.0
    %137 = vmatpush1.msra.mxu0 0.0
    %138 = vmatprep.subr.mxu0 0.0
    %139 = vmatpush1.msra.mxu0 0.0
    %140 = vmatprep.subr.mxu0 0.0
    %141 = vmatpush1.msra.mxu0 0.0
    %142 = vmatprep.subr.mxu0 0.0
    %143 = vmatpush1.msra.mxu0 0.0
    %144 = vmatprep.subr.mxu0 0.0
    %145 = vmatpush1.msra.mxu0 0.0
    %146 = vmatprep.subr.mxu0 0.0
    %147 = vmatpush1.msra.mxu0 0.0
    %148 = vmatprep.subr.mxu0 0.0
    %149 = vmatpush1.msra.mxu0 0.0
    %150 = vmatprep.subr.mxu0 0.0
    %151 = vmatpush1.msra.mxu0 0.0
    %152 = vmatprep.subr.mxu0 0.0
    %153 = vmatpush1.msra.mxu0 0.0
    %154 = vmatprep.subr.mxu0 0.0
    %155 = vmatpush1.msra.mxu0 0.0
    %156 = vmatprep.subr.mxu0 0.0
    %157 = vmatpush1.msra.mxu0 0.0
    %158 = vmatprep.subr.mxu0 0.0
    %159 = vmatpush1.msra.mxu0 0.0
    %160 = vmatprep.subr.mxu0 0.0
    %161 = vmatpush1.msra.mxu0 0.0
    %162 = vmatprep.subr.mxu0 0.0
    %163 = vmatpush1.msra.mxu0 0.0
    %164 = vmatprep.subr.mxu0 0.0
    %165 = vmatpush1.msra.mxu0 0.0
    %166 = vmatprep.mubr.f32.mxu0 0.0
    %167 = vmatmul.mubr.f32.gmra.mrb[0].mxu0 %v56
    %v168 = vpop.f32.mrb[0].mxu0
    %v169 = vadd.f32 %v95, %v168
    %v170 = vpop.f32.mrb[0].mxu0
    %v171 = vadd.f32 %v99, %v170
    %172 = vmatprep.mubr.f32.mxu0 0.0
    %173 = vmatmul.mubr.f32.gmra.mrb[0].mxu0 %v57
    %v174 = vpop.f32.mrb[0].mxu0
    %v175 = vadd.f32 %v95, %v174
    %v176 = vpop.f32.mrb[0].mxu0
    %v177 = vadd.f32 %v99, %v176
    %178 = vdwg.mxu0
    %v179 = vmax.f32 %v169, 0.0
    %v180 = vmax.f32 %v175, 0.0
    %v181 = vxor.u32 %v171, 2147483648
    %v182 = vxor.u32 %v177, 2147483648
    %v183 = vmul.f32 %v181, 1.442695
    %v184 = vpow.pop %v183
    %v185 = vmul.f32 %v182, 1.442695
    %v186 = vpow.pop %v185
    %v187 = vadd.f32 %v184, 1.0
    %v188 = vadd.f32 %v186, 1.0
    %v189 = vrcp.pop %v187
    %v190 = vmul.f32 1.0, %v189
    %v191 = vrcp.pop %v188
    %v192 = vmul.f32 1.0, %v191
    %v193 = vsub.f32 %v56, %v179
    %v194 = vsub.f32 %v57, %v180
    %v195 = vmul.f32 %v190, %v193
    %v196 = vmul.f32 %v192, %v194
    %v197 = vadd.f32 %v179, %v195
    %v198 = vadd.f32 %v180, %v196
    %s199 = scalar_lea.vmem [#allocation5], 256
    %v200 = vld [vmem:[%s199] sm:$0xff]
    %v201 = vld [vmem:[%s199 + $0x8] sm:$0xff]
    %v202 = vld [vmem:[%s199 + $0x10] sm:$0xff]
    %v203 = vld [vmem:[%s199 + $0x18] sm:$0xff]
    %v204 = vld [vmem:[%s199 + $0x20] sm:$0xff]
    %v205 = vld [vmem:[%s199 + $0x28] sm:$0xff]
    %v206 = vld [vmem:[%s199 + $0x30] sm:$0xff]
    %v207 = vld [vmem:[%s199 + $0x38] sm:$0xff]
    %v208 = vld [vmem:[%s199 + $0x40] sm:$0xff]
    %v209 = vld [vmem:[%s199 + $0x48] sm:$0xff]
    %v210 = vld [vmem:[%s199 + $0x50] sm:$0xff]
    %v211 = vld [vmem:[%s199 + $0x58] sm:$0xff]
    %v212 = vld [vmem:[%s199 + $0x60] sm:$0xff]
    %v213 = vld [vmem:[%s199 + $0x68] sm:$0xff]
    %v214 = vld [vmem:[%s199 + $0x70] sm:$0xff]
    %v215 = vld [vmem:[%s199 + $0x78] sm:$0xff]
    %v216 = vld [vmem:[%s199 + $0x80] sm:$0xff]
    %v217 = vld [vmem:[%s199 + $0x88] sm:$0xff]
    %v218 = vld [vmem:[%s199 + $0x90] sm:$0xff]
    %v219 = vld [vmem:[%s199 + $0x98] sm:$0xff]
    %v220 = vld [vmem:[%s199 + $0xa0] sm:$0xff]
    %v221 = vld [vmem:[%s199 + $0xa8] sm:$0xff]
    %v222 = vld [vmem:[%s199 + $0xb0] sm:$0xff]
    %v223 = vld [vmem:[%s199 + $0xb8] sm:$0xff]
    %v224 = vld [vmem:[%s199 + $0xc0] sm:$0xff]
    %v225 = vld [vmem:[%s199 + $0xc8] sm:$0xff]
    %v226 = vld [vmem:[%s199 + $0xd0] sm:$0xff]
    %v227 = vld [vmem:[%s199 + $0xd8] sm:$0xff]
    %v228 = vld [vmem:[%s199 + $0xe0] sm:$0xff]
    %v229 = vld [vmem:[%s199 + $0xe8] sm:$0xff]
    %v230 = vld [vmem:[%s199 + $0xf0] sm:$0xff]
    %v231 = vld [vmem:[%s199 + $0xf8] sm:$0xff]
    %s232 = scalar_lea.vmem [#allocation7], 2
    %v233 = vld [vmem:[%s232] sm:$0x3]
    %v235 = vlaneseq
    %v236 = vshrl.u32 %v235, 7
    %v237 = vsub.s32 0, %v236
    %v238 = vrot.slane %v233, %v237
    %v239 = vlaneseq
    %v240 = vshrl.u32 %v239, 7
    %v241 = vsub.s32 1, %v240
    %v242 = vrot.slane %v233, %v241
    %245 = vmatprep.subr.mxu0 %v201
    %246 = vmatpush1.msra.mxu0 %v200
    %247 = vmatprep.subr.mxu0 %v203
    %248 = vmatpush1.msra.mxu0 %v202
    %249 = vmatprep.subr.mxu0 %v205
    %250 = vmatpush1.msra.mxu0 %v204
    %251 = vmatprep.subr.mxu0 %v207
    %252 = vmatpush1.msra.mxu0 %v206
    %253 = vmatprep.subr.mxu0 %v209
    %254 = vmatpush1.msra.mxu0 %v208
    %255 = vmatprep.subr.mxu0 %v211
    %256 = vmatpush1.msra.mxu0 %v210
    %257 = vmatprep.subr.mxu0 %v213
    %258 = vmatpush1.msra.mxu0 %v212
    %259 = vmatprep.subr.mxu0 %v215
    %260 = vmatpush1.msra.mxu0 %v214
    %261 = vmatprep.subr.mxu0 %v217
    %262 = vmatpush1.msra.mxu0 %v216
    %263 = vmatprep.subr.mxu0 %v219
    %264 = vmatpush1.msra.mxu0 %v218
    %265 = vmatprep.subr.mxu0 %v221
    %266 = vmatpush1.msra.mxu0 %v220
    %267 = vmatprep.subr.mxu0 %v223
    %268 = vmatpush1.msra.mxu0 %v222
    %269 = vmatprep.subr.mxu0 %v225
    %270 = vmatpush1.msra.mxu0 %v224
    %271 = vmatprep.subr.mxu0 %v227
    %272 = vmatpush1.msra.mxu0 %v226
    %273 = vmatprep.subr.mxu0 %v229
    %274 = vmatpush1.msra.mxu0 %v228
    %275 = vmatprep.subr.mxu0 %v231
    %276 = vmatpush1.msra.mxu0 %v230
    %277 = vmatprep.subr.mxu0 0.0
    %278 = vmatpush1.msra.mxu0 0.0
    %279 = vmatprep.subr.mxu0 0.0
    %280 = vmatpush1.msra.mxu0 0.0
    %281 = vmatprep.subr.mxu0 0.0
    %282 = vmatpush1.msra.mxu0 0.0
    %283 = vmatprep.subr.mxu0 0.0
    %284 = vmatpush1.msra.mxu0 0.0
    %285 = vmatprep.subr.mxu0 0.0
    %286 = vmatpush1.msra.mxu0 0.0
    %287 = vmatprep.subr.mxu0 0.0
    %288 = vmatpush1.msra.mxu0 0.0
    %289 = vmatprep.subr.mxu0 0.0
    %290 = vmatpush1.msra.mxu0 0.0
    %291 = vmatprep.subr.mxu0 0.0
    %292 = vmatpush1.msra.mxu0 0.0
    %293 = vmatprep.subr.mxu0 0.0
    %294 = vmatpush1.msra.mxu0 0.0
    %295 = vmatprep.subr.mxu0 0.0
    %296 = vmatpush1.msra.mxu0 0.0
    %297 = vmatprep.subr.mxu0 0.0
    %298 = vmatpush1.msra.mxu0 0.0
    %299 = vmatprep.subr.mxu0 0.0
    %300 = vmatpush1.msra.mxu0 0.0
    %301 = vmatprep.subr.mxu0 0.0
    %302 = vmatpush1.msra.mxu0 0.0
    %303 = vmatprep.subr.mxu0 0.0
    %304 = vmatpush1.msra.mxu0 0.0
    %305 = vmatprep.subr.mxu0 0.0
    %306 = vmatpush1.msra.mxu0 0.0
    %307 = vmatprep.subr.mxu0 0.0
    %308 = vmatpush1.msra.mxu0 0.0
    %309 = vmatprep.mubr.f32.mxu0 0.0
    %310 = vmatmul.mubr.f32.gmra.mrb[0].mxu0 %v197
    %v311 = vpop.f32.mrb[0].mxu0
    %v312 = vadd.f32 %v238, %v311
    %v313 = vpop.f32.mrb[0].mxu0
    %v314 = vadd.f32 %v242, %v313
    %315 = vmatprep.mubr.f32.mxu0 0.0
    %316 = vmatmul.mubr.f32.gmra.mrb[0].mxu0 %v198
    %v317 = vpop.f32.mrb[0].mxu0
    %v318 = vadd.f32 %v238, %v317
    %v319 = vpop.f32.mrb[0].mxu0
    %v320 = vadd.f32 %v242, %v319
    %321 = vdwg.mxu0
    %v322 = vmax.f32 %v312, 0.0
    %v323 = vmax.f32 %v318, 0.0
    %v324 = vxor.u32 %v314, 2147483648
    %v325 = vxor.u32 %v320, 2147483648
    %v326 = vmul.f32 %v324, 1.442695
    %v327 = vpow.pop %v326
    %v328 = vmul.f32 %v325, 1.442695
    %v329 = vpow.pop %v328
    %v330 = vadd.f32 %v327, 1.0
    %v331 = vadd.f32 %v329, 1.0
    %v332 = vrcp.pop %v330
    %v333 = vmul.f32 1.0, %v332
    %v334 = vrcp.pop %v331
    %v335 = vmul.f32 1.0, %v334
    %v336 = vsub.f32 %v197, %v322
    %v337 = vsub.f32 %v198, %v323
    %v338 = vmul.f32 %v333, %v336
    %v339 = vmul.f32 %v335, %v337
    %v340 = vadd.f32 %v322, %v338
    %v341 = vadd.f32 %v323, %v339
    %342 = vst [vmem:[#allocation8] sm:$0xff] %v340
    %343 = vst [vmem:[#allocation8 + $0x8] sm:$0xff] %v341
    // Predicated region
    $region26: #{tpu_custom_call.1} parent=1 // pred_check
      _
    $region27: #{tpu_custom_call.1} parent=1 // pred_check_branch
      %345 = sbr.rel (0) target = $region29
    $region28: #{tpu_custom_call.1} parent=1 // pred_region
      %s347 = ssub.s32 256, 256
      %348 = vsyncadd [#allocation4], %s347
      %s349 = sshll.u32 [#allocation8], 4
      %s350 = int_to_ptr.vmem [resolvable:$true] %s349
      %355 = dma.vmem_to_hbm [thread:$0]  %s350, 256, %s3, [#allocation4], 128, 128, 8
    $region29: #{tpu_custom_call.1} parent=1 // pred_fallthru
      _
    // Predicated region
    $region30: #{tpu_custom_call.1} parent=1 // pred_check
      _
    $region31: #{tpu_custom_call.1} parent=1 // pred_check_branch
      %357 = sbr.rel (0) target = $region33
    $region32: #{tpu_custom_call.1} parent=1 // pred_region
      %358 = dma.done [#allocation4], 256
    $region33: #{tpu_custom_call.1} parent=1 // pred_fallthru
      _
    %359 = vsyncpa [#allocation3], 1
    %360 = vsyncpa [#allocation6], 1
    %361 = vsyncpa [#allocation4], 1

// kernel: tpu_custom_call.1
$region0: #{tpu_custom_call.1}
  #allocation0 [shape = 'u32[]', space=smem, size = 0x4, offset = 0x4, fixed_abs, tag = 'smem constant byte address 0x4 - core index']
  #allocation1 [shape = 'u32[144,128]{1,0:T(1,128)}', space=vmem, size = 0x12000, scoped, tag = 'internal scratch']
  %s0 = inlined_call_operand.hbm [shape: f32[16,128], index: 0, kind: input, shape index: {}]
  %s1 = inlined_call_operand.hbm [shape: f32[2,128,256], index: 1, kind: input, shape index: {}]
  %s2 = inlined_call_operand.hbm [shape: f32[2,1,256], index: 2, kind: input, shape index: {}]
  %s3 = inlined_call_operand.hbm [shape: f32[16,128], index: 3, kind: output, shape index: {}]
  %s4 = sld [smem:[#allocation0]]
  $region34: #{tpu_custom_call.1} parent=0
    _
  %s6 = ssub.s32 1, %s4
  %s7 = scalar_select 0, %s6, %s4
  $region1: #{tpu_custom_call.1} parent=0
    #allocation2 [shape = 'u8[8192]{0}', space=vmem, size = 0x2000, scoped, tag = 'input window, operand 0, single buffered']
    #allocation3 [shape = 's32[1]{0}', space=sflag, size = 0x4, scoped, tag = 'scoped memory for tpu_custom_call.1']
    #allocation4 [shape = 's32[1]{0}', space=sflag, size = 0x4, scoped, tag = 'scoped memory for tpu_custom_call.1']
    #allocation5 [shape = 'u8[262144]{0}', space=vmem, size = 0x40000, scoped, tag = 'input window, operand 1, single buffered']
    #allocation6 [shape = 's32[1]{0}', space=sflag, size = 0x4, scoped, tag = 'scoped memory for tpu_custom_call.1']
    #allocation7 [shape = 'u8[2048]{0}', space=vmem, size = 0x800, scoped, tag = 'input window, operand 2, single buffered']
    #allocation8 [shape = 'u8[8192]{0}', space=vmem, size = 0x2000, scoped, tag = 'output window, operand 0, single buffered']
    %8 = vsyncpa [#allocation3], 0
    %9 = vsyncpa [#allocation6], 0
    %10 = vsyncpa [#allocation4], 0
    // Predicated region
    $region2: #{tpu_custom_call.1} parent=1 // pred_check
      _
    $region3: #{tpu_custom_call.1} parent=1 // pred_check_branch
      %12 = sbr.rel (0) target = $region5
    $region4: #{tpu_custom_call.1} parent=1 // pred_region
      %s14 = ssub.s32 256, 256
      %15 = vsyncadd [#allocation3], %s14
      %s16 = sshll.u32 [#allocation2], 4
      %s17 = int_to_ptr.vmem [resolvable:$true] %s16
      %22 = dma.hbm_to_vmem [thread:$0]  %s0, 256, %s17, [#allocation3], 128, 128, 8
    $region5: #{tpu_custom_call.1} parent=1 // pred_fallthru
      _
    // Predicated region
    $region6: #{tpu_custom_call.1} parent=1 // pred_check
      _
    $region7: #{tpu_custom_call.1} parent=1 // pred_check_branch
      %24 = sbr.rel (0) target = $region9
    $region8: #{tpu_custom_call.1} parent=1 // pred_region
      %s26 = ssub.s32 8192, 8192
      %27 = vsyncadd [#allocation6], %s26
      %s28 = sshll.u32 [#allocation5], 4
      %s29 = int_to_ptr.vmem [resolvable:$true] %s28
      %34 = dma.hbm_to_vmem [thread:$0]  %s1, 8192, %s29, [#allocation6], 256, 256, 16
    $region9: #{tpu_custom_call.1} parent=1 // pred_fallthru
      _
    // Predicated region
    $region10: #{tpu_custom_call.1} parent=1 // pred_check
      _
    $region11: #{tpu_custom_call.1} parent=1 // pred_check_branch
      %36 = sbr.rel (0) target = $region13
    $region12: #{tpu_custom_call.1} parent=1 // pred_region
      %s38 = ssub.s32 64, 64
      %39 = vsyncadd [#allocation6], %s38
      %s40 = sshll.u32 [#allocation7], 4
      %s41 = int_to_ptr.vmem [resolvable:$true] %s40
      %46 = dma.hbm_to_vmem [thread:$0]  %s2, 64, %s41, [#allocation6], 32, 32, 2
    $region13: #{tpu_custom_call.1} parent=1 // pred_fallthru
      _
    // Predicated region
    $region14: #{tpu_custom_call.1} parent=1 // pred_check
      _
    $region15: #{tpu_custom_call.1} parent=1 // pred_check_branch
      %48 = sbr.rel (0) target = $region17
    $region16: #{tpu_custom_call.1} parent=1 // pred_region
      %49 = dma.done [#allocation3], 256
    $region17: #{tpu_custom_call.1} parent=1 // pred_fallthru
      _
    // Predicated region
    $region18: #{tpu_custom_call.1} parent=1 // pred_check
      _
    $region19: #{tpu_custom_call.1} parent=1 // pred_check_branch
      %51 = sbr.rel (0) target = $region21
    $region20: #{tpu_custom_call.1} parent=1 // pred_region
      %52 = dma.done [#allocation6], 8192
    $region21: #{tpu_custom_call.1} parent=1 // pred_fallthru
      _
    // Predicated region
    $region22: #{tpu_custom_call.1} parent=1 // pred_check
      _
    $region23: #{tpu_custom_call.1} parent=1 // pred_check_branch
      %54 = sbr.rel (0) target = $region25
    $region24: #{tpu_custom_call.1} parent=1 // pred_region
      %55 = dma.done [#allocation6], 64
    $region25: #{tpu_custom_call.1} parent=1 // pred_fallthru
      _
    %v56 = vld [vmem:[#allocation2] sm:$0xff]
    %v57 = vld [vmem:[#allocation2 + $0x8] sm:$0xff]
    %v58 = vld [vmem:[#allocation5] sm:$0xff]
    %v59 = vld [vmem:[#allocation5 + $0x8] sm:$0xff]
    %v60 = vld [vmem:[#allocation5 + $0x10] sm:$0xff]
    %v61 = vld [vmem:[#allocation5 + $0x18] sm:$0xff]
    %v62 = vld [vmem:[#allocation5 + $0x20] sm:$0xff]
    %v63 = vld [vmem:[#allocation5 + $0x28] sm:$0xff]
    %v64 = vld [vmem:[#allocation5 + $0x30] sm:$0xff]
    %v65 = vld [vmem:[#allocation5 + $0x38] sm:$0xff]
    %v66 = vld [vmem:[#allocation5 + $0x40] sm:$0xff]
    %v67 = vld [vmem:[#allocation5 + $0x48] sm:$0xff]
    %v68 = vld [vmem:[#allocation5 + $0x50] sm:$0xff]
    %v69 = vld [vmem:[#allocation5 + $0x58] sm:$0xff]
    %v70 = vld [vmem:[#allocation5 + $0x60] sm:$0xff]
    %v71 = vld [vmem:[#allocation5 + $0x68] sm:$0xff]
    %v72 = vld [vmem:[#allocation5 + $0x70] sm:$0xff]
    %v73 = vld [vmem:[#allocation5 + $0x78] sm:$0xff]
    %v74 = vld [vmem:[#allocation5 + $0x80] sm:$0xff]
    %v75 = vld [vmem:[#allocation5 + $0x88] sm:$0xff]
    %v76 = vld [vmem:[#allocation5 + $0x90] sm:$0xff]
    %v77 = vld [vmem:[#allocation5 + $0x98] sm:$0xff]
    %v78 = vld [vmem:[#allocation5 + $0xa0] sm:$0xff]
    %v79 = vld [vmem:[#allocation5 + $0xa8] sm:$0xff]
    %v80 = vld [vmem:[#allocation5 + $0xb0] sm:$0xff]
    %v81 = vld [vmem:[#allocation5 + $0xb8] sm:$0xff]
    %v82 = vld [vmem:[#allocation5 + $0xc0] sm:$0xff]
    %v83 = vld [vmem:[#allocation5 + $0xc8] sm:$0xff]
    %v84 = vld [vmem:[#allocation5 + $0xd0] sm:$0xff]
    %v85 = vld [vmem:[#allocation5 + $0xd8] sm:$0xff]
    %v86 = vld [vmem:[#allocation5 + $0xe0] sm:$0xff]
    %v87 = vld [vmem:[#allocation5 + $0xe8] sm:$0xff]
    %v88 = vld [vmem:[#allocation5 + $0xf0] sm:$0xff]
    %v89 = vld [vmem:[#allocation5 + $0xf8] sm:$0xff]
    %v90 = vld [vmem:[#allocation7] sm:$0x3]
    %v92 = vlaneseq
    %v93 = vshrl.u32 %v92, 7
    %v94 = vsub.s32 0, %v93
    %v95 = vrot.slane %v90, %v94
    %v96 = vlaneseq
    %v97 = vshrl.u32 %v96, 7
    %v98 = vsub.s32 1, %v97
    %v99 = vrot.slane %v90, %v98
    %102 = vmatprep.subr.mxu0 %v59
    %103 = vmatpush1.msra.mxu0 %v58
    %104 = vmatprep.subr.mxu0 %v61
    %105 = vmatpush1.msra.mxu0 %v60
    %106 = vmatprep.subr.mxu0 %v63
    %107 = vmatpush1.msra.mxu0 %v62
    %108 = vmatprep.subr.mxu0 %v65
    %109 = vmatpush1.msra.mxu0 %v64
    %110 = vmatprep.subr.mxu0 %v67
    %111 = vmatpush1.msra.mxu0 %v66
    %112 = vmatprep.subr.mxu0 %v69
    %113 = vmatpush1.msra.mxu0 %v68
    %114 = vmatprep.subr.mxu0 %v71
    %115 = vmatpush1.msra.mxu0 %v70
    %116 = vmatprep.subr.mxu0 %v73
    %117 = vmatpush1.msra.mxu0 %v72
    %118 = vmatprep.subr.mxu0 %v75
    %119 = vmatpush1.msra.mxu0 %v74
    %120 = vmatprep.subr.mxu0 %v77
    %121 = vmatpush1.msra.mxu0 %v76
    %122 = vmatprep.subr.mxu0 %v79
    %123 = vmatpush1.msra.mxu0 %v78
    %124 = vmatprep.subr.mxu0 %v81
    %125 = vmatpush1.msra.mxu0 %v80
    %126 = vmatprep.subr.mxu0 %v83
    %127 = vmatpush1.msra.mxu0 %v82
    %128 = vmatprep.subr.mxu0 %v85
    %129 = vmatpush1.msra.mxu0 %v84
    %130 = vmatprep.subr.mxu0 %v87
    %131 = vmatpush1.msra.mxu0 %v86
    %132 = vmatprep.subr.mxu0 %v89
    %133 = vmatpush1.msra.mxu0 %v88
    %134 = vmatprep.subr.mxu0 0.0
    %135 = vmatpush1.msra.mxu0 0.0
    %136 = vmatprep.subr.mxu0 0.0
    %137 = vmatpush1.msra.mxu0 0.0
    %138 = vmatprep.subr.mxu0 0.0
    %139 = vmatpush1.msra.mxu0 0.0
    %140 = vmatprep.subr.mxu0 0.0
    %141 = vmatpush1.msra.mxu0 0.0
    %142 = vmatprep.subr.mxu0 0.0
    %143 = vmatpush1.msra.mxu0 0.0
    %144 = vmatprep.subr.mxu0 0.0
    %145 = vmatpush1.msra.mxu0 0.0
    %146 = vmatprep.subr.mxu0 0.0
    %147 = vmatpush1.msra.mxu0 0.0
    %148 = vmatprep.subr.mxu0 0.0
    %149 = vmatpush1.msra.mxu0 0.0
    %150 = vmatprep.subr.mxu0 0.0
    %151 = vmatpush1.msra.mxu0 0.0
    %152 = vmatprep.subr.mxu0 0.0
    %153 = vmatpush1.msra.mxu0 0.0
    %154 = vmatprep.subr.mxu0 0.0
    %155 = vmatpush1.msra.mxu0 0.0
    %156 = vmatprep.subr.mxu0 0.0
    %157 = vmatpush1.msra.mxu0 0.0
    %158 = vmatprep.subr.mxu0 0.0
    %159 = vmatpush1.msra.mxu0 0.0
    %160 = vmatprep.subr.mxu0 0.0
    %161 = vmatpush1.msra.mxu0 0.0
    %162 = vmatprep.subr.mxu0 0.0
    %163 = vmatpush1.msra.mxu0 0.0
    %164 = vmatprep.subr.mxu0 0.0
    %165 = vmatpush1.msra.mxu0 0.0
    %166 = vmatprep.mubr.f32.mxu0 0.0
    %167 = vmatmul.mubr.f32.gmra.mrb[0].mxu0 %v56
    %v168 = vpop.f32.mrb[0].mxu0
    %v169 = vadd.f32 %v95, %v168
    %v170 = vpop.f32.mrb[0].mxu0
    %v171 = vadd.f32 %v99, %v170
    %172 = vmatprep.mubr.f32.mxu0 0.0
    %173 = vmatmul.mubr.f32.gmra.mrb[0].mxu0 %v57
    %v174 = vpop.f32.mrb[0].mxu0
    %v175 = vadd.f32 %v95, %v174
    %v176 = vpop.f32.mrb[0].mxu0
    %v177 = vadd.f32 %v99, %v176
    %178 = vdwg.mxu0
    %v179 = vmax.f32 %v169, 0.0
    %v180 = vmax.f32 %v175, 0.0
    %v181 = vxor.u32 %v171, 2147483648
    %v182 = vxor.u32 %v177, 2147483648
    %v183 = vmul.f32 %v181, 1.442695
    %v184 = vpow.pop %v183
    %v185 = vmul.f32 %v182, 1.442695
    %v186 = vpow.pop %v185
    %v187 = vadd.f32 %v184, 1.0
    %v188 = vadd.f32 %v186, 1.0
    %v189 = vrcp.pop %v187
    %v190 = vmul.f32 1.0, %v189
    %v191 = vrcp.pop %v188
    %v192 = vmul.f32 1.0, %v191
    %v193 = vsub.f32 %v56, %v179
    %v194 = vsub.f32 %v57, %v180
    %v195 = vmul.f32 %v190, %v193
    %v196 = vmul.f32 %v192, %v194
    %v197 = vadd.f32 %v179, %v195
    %v198 = vadd.f32 %v180, %v196
    %s199 = scalar_lea.vmem [#allocation5], 256
    %v200 = vld [vmem:[%s199] sm:$0xff]
    %v201 = vld [vmem:[%s199 + $0x8] sm:$0xff]
    %v202 = vld [vmem:[%s199 + $0x10] sm:$0xff]
    %v203 = vld [vmem:[%s199 + $0x18] sm:$0xff]
    %v204 = vld [vmem:[%s199 + $0x20] sm:$0xff]
    %v205 = vld [vmem:[%s199 + $0x28] sm:$0xff]
    %v206 = vld [vmem:[%s199 + $0x30] sm:$0xff]
    %v207 = vld [vmem:[%s199 + $0x38] sm:$0xff]
    %v208 = vld [vmem:[%s199 + $0x40] sm:$0xff]
    %v209 = vld [vmem:[%s199 + $0x48] sm:$0xff]
    %v210 = vld [vmem:[%s199 + $0x50] sm:$0xff]
    %v211 = vld [vmem:[%s199 + $0x58] sm:$0xff]
    %v212 = vld [vmem:[%s199 + $0x60] sm:$0xff]
    %v213 = vld [vmem:[%s199 + $0x68] sm:$0xff]
    %v214 = vld [vmem:[%s199 + $0x70] sm:$0xff]
    %v215 = vld [vmem:[%s199 + $0x78] sm:$0xff]
    %v216 = vld [vmem:[%s199 + $0x80] sm:$0xff]
    %v217 = vld [vmem:[%s199 + $0x88] sm:$0xff]
    %v218 = vld [vmem:[%s199 + $0x90] sm:$0xff]
    %v219 = vld [vmem:[%s199 + $0x98] sm:$0xff]
    %v220 = vld [vmem:[%s199 + $0xa0] sm:$0xff]
    %v221 = vld [vmem:[%s199 + $0xa8] sm:$0xff]
    %v222 = vld [vmem:[%s199 + $0xb0] sm:$0xff]
    %v223 = vld [vmem:[%s199 + $0xb8] sm:$0xff]
    %v224 = vld [vmem:[%s199 + $0xc0] sm:$0xff]
    %v225 = vld [vmem:[%s199 + $0xc8] sm:$0xff]
    %v226 = vld [vmem:[%s199 + $0xd0] sm:$0xff]
    %v227 = vld [vmem:[%s199 + $0xd8] sm:$0xff]
    %v228 = vld [vmem:[%s199 + $0xe0] sm:$0xff]
    %v229 = vld [vmem:[%s199 + $0xe8] sm:$0xff]
    %v230 = vld [vmem:[%s199 + $0xf0] sm:$0xff]
    %v231 = vld [vmem:[%s199 + $0xf8] sm:$0xff]
    %s232 = scalar_lea.vmem [#allocation7], 2
    %v233 = vld [vmem:[%s232] sm:$0x3]
    %v235 = vlaneseq
    %v236 = vshrl.u32 %v235, 7
    %v237 = vsub.s32 0, %v236
    %v238 = vrot.slane %v233, %v237
    %v239 = vlaneseq
    %v240 = vshrl.u32 %v239, 7
    %v241 = vsub.s32 1, %v240
    %v242 = vrot.slane %v233, %v241
    %245 = vmatprep.subr.mxu0 %v201
    %246 = vmatpush1.msra.mxu0 %v200
    %247 = vmatprep.subr.mxu0 %v203
    %248 = vmatpush1.msra.mxu0 %v202
    %249 = vmatprep.subr.mxu0 %v205
    %250 = vmatpush1.msra.mxu0 %v204
    %251 = vmatprep.subr.mxu0 %v207
    %252 = vmatpush1.msra.mxu0 %v206
    %253 = vmatprep.subr.mxu0 %v209
    %254 = vmatpush1.msra.mxu0 %v208
    %255 = vmatprep.subr.mxu0 %v211
    %256 = vmatpush1.msra.mxu0 %v210
    %257 = vmatprep.subr.mxu0 %v213
    %258 = vmatpush1.msra.mxu0 %v212
    %259 = vmatprep.subr.mxu0 %v215
    %260 = vmatpush1.msra.mxu0 %v214
    %261 = vmatprep.subr.mxu0 %v217
    %262 = vmatpush1.msra.mxu0 %v216
    %263 = vmatprep.subr.mxu0 %v219
    %264 = vmatpush1.msra.mxu0 %v218
    %265 = vmatprep.subr.mxu0 %v221
    %266 = vmatpush1.msra.mxu0 %v220
    %267 = vmatprep.subr.mxu0 %v223
    %268 = vmatpush1.msra.mxu0 %v222
    %269 = vmatprep.subr.mxu0 %v225
    %270 = vmatpush1.msra.mxu0 %v224
    %271 = vmatprep.subr.mxu0 %v227
    %272 = vmatpush1.msra.mxu0 %v226
    %273 = vmatprep.subr.mxu0 %v229
    %274 = vmatpush1.msra.mxu0 %v228
    %275 = vmatprep.subr.mxu0 %v231
    %276 = vmatpush1.msra.mxu0 %v230
    %277 = vmatprep.subr.mxu0 0.0
    %278 = vmatpush1.msra.mxu0 0.0
    %279 = vmatprep.subr.mxu0 0.0
    %280 = vmatpush1.msra.mxu0 0.0
    %281 = vmatprep.subr.mxu0 0.0
    %282 = vmatpush1.msra.mxu0 0.0
    %283 = vmatprep.subr.mxu0 0.0
    %284 = vmatpush1.msra.mxu0 0.0
    %285 = vmatprep.subr.mxu0 0.0
    %286 = vmatpush1.msra.mxu0 0.0
    %287 = vmatprep.subr.mxu0 0.0
    %288 = vmatpush1.msra.mxu0 0.0
    %289 = vmatprep.subr.mxu0 0.0
    %290 = vmatpush1.msra.mxu0 0.0
    %291 = vmatprep.subr.mxu0 0.0
    %292 = vmatpush1.msra.mxu0 0.0
    %293 = vmatprep.subr.mxu0 0.0
    %294 = vmatpush1.msra.mxu0 0.0
    %295 = vmatprep.subr.mxu0 0.0
    %296 = vmatpush1.msra.mxu0 0.0
    %297 = vmatprep.subr.mxu0 0.0
    %298 = vmatpush1.msra.mxu0 0.0
    %299 = vmatprep.subr.mxu0 0.0
    %300 = vmatpush1.msra.mxu0 0.0
    %301 = vmatprep.subr.mxu0 0.0
    %302 = vmatpush1.msra.mxu0 0.0
    %303 = vmatprep.subr.mxu0 0.0
    %304 = vmatpush1.msra.mxu0 0.0
    %305 = vmatprep.subr.mxu0 0.0
    %306 = vmatpush1.msra.mxu0 0.0
    %307 = vmatprep.subr.mxu0 0.0
    %308 = vmatpush1.msra.mxu0 0.0
    %309 = vmatprep.mubr.f32.mxu0 0.0
    %310 = vmatmul.mubr.f32.gmra.mrb[0].mxu0 %v197
    %v311 = vpop.f32.mrb[0].mxu0
    %v312 = vadd.f32 %v238, %v311
    %v313 = vpop.f32.mrb[0].mxu0
    %v314 = vadd.f32 %v242, %v313
    %315 = vmatprep.mubr.f32.mxu0 0.0
    %316 = vmatmul.mubr.f32.gmra.mrb[0].mxu0 %v198
    %v317 = vpop.f32.mrb[0].mxu0
    %v318 = vadd.f32 %v238, %v317
    %v319 = vpop.f32.mrb[0].mxu0
    %v320 = vadd.f32 %v242, %v319
    %321 = vdwg.mxu0
    %v322 = vmax.f32 %v312, 0.0
    %v323 = vmax.f32 %v318, 0.0
    %v324 = vxor.u32 %v314, 2147483648
    %v325 = vxor.u32 %v320, 2147483648
    %v326 = vmul.f32 %v324, 1.442695
    %v327 = vpow.pop %v326
    %v328 = vmul.f32 %v325, 1.442695
    %v329 = vpow.pop %v328
    %v330 = vadd.f32 %v327, 1.0
    %v331 = vadd.f32 %v329, 1.0
    %v332 = vrcp.pop %v330
    %v333 = vmul.f32 1.0, %v332
    %v334 = vrcp.pop %v331
    %v335 = vmul.f32 1.0, %v334
    %v336 = vsub.f32 %v197, %v322
    %v337 = vsub.f32 %v198, %v323
    %v338 = vmul.f32 %v333, %v336
    %v339 = vmul.f32 %v335, %v337
    %v340 = vadd.f32 %v322, %v338
    %v341 = vadd.f32 %v323, %v339
    %342 = vst [vmem:[#allocation8] sm:$0xff] %v340
    %343 = vst [vmem:[#allocation8 + $0x8] sm:$0xff] %v341
    // Predicated region
    $region26: #{tpu_custom_call.1} parent=1 // pred_check
      _
    $region27: #{tpu_custom_call.1} parent=1 // pred_check_branch
      %345 = sbr.rel (0) target = $region29
    $region28: #{tpu_custom_call.1} parent=1 // pred_region
      %s347 = ssub.s32 256, 256
      %348 = vsyncadd [#allocation4], %s347
      %s349 = sshll.u32 [#allocation8], 4
      %s350 = int_to_ptr.vmem [resolvable:$true] %s349
      %355 = dma.vmem_to_hbm [thread:$0]  %s350, 256, %s3, [#allocation4], 128, 128, 8
    $region29: #{tpu_custom_call.1} parent=1 // pred_fallthru
      _
    // Predicated region
    $region30: #{tpu_custom_call.1} parent=1 // pred_check
      _
    $region31: #{tpu_custom_call.1} parent=1 // pred_check_branch
      %357 = sbr.rel (0) target = $region33
    $region32: #{tpu_custom_call.1} parent=1 // pred_region
      %358 = dma.done [#allocation4], 256
    $region33: #{tpu_custom_call.1} parent=1 // pred_fallthru
      _
    %359 = vsyncpa [#allocation3], 1
    %360 = vsyncpa [#allocation6], 1
    %361 = vsyncpa [#allocation4], 1

</llo_original>
